<compile_context>
chip_gen: v5e
topology: v5e:2x2
jax: 0.10.0
libtpu: 0.0.40
codegen_flags: <defaults>
</compile_context>

<pallas_src>
import functools

import jax
import jax.numpy as jnp
from jax.experimental import pallas as pl
from jax.experimental.pallas import tpu as pltpu


def _grad_error_kernel(x_ref, m_ref, out_ref, *, num_scales: int, img_w: int,
                       gate_mask_sums: bool):
    """One grid step = one lane-packed group of images.

    x_ref, m_ref : (H, P*img_w) VMEM blocks, P images packed along lanes.
    out_ref      : (1, 2*num_scales) f32 partial sums:
                   lane s              -> sum(grad_x)+sum(grad_y) at scale s
                                          (all packed images of this step)
                   lane num_scales + s -> sum(mask[::step, ::step]) of the
                                          FIRST batch image (grid step 0 only).
    """
    x = x_ref[...].astype(jnp.float32)
    m = m_ref[...].astype(jnp.float32)
    h, wp = x.shape
    d = m * x                        # torch: diff = mask * x

    row = jax.lax.broadcasted_iota(jnp.int32, (h, wp), 0)
    col = jax.lax.broadcasted_iota(jnp.int32, (h, wp), 1)
    if wp == img_w:
        colw = col
    elif img_w & (img_w - 1) == 0:   # power-of-two image width (bitwise mod)
        colw = col & (img_w - 1)
    else:
        colw = col % img_w

    lane = jax.lax.broadcasted_iota(jnp.int32, (1, 2 * num_scales), 1)
    out_row = jnp.zeros((1, 2 * num_scales), jnp.float32)

    subs = []   # per-scale subgrid indicator (None == identically True, s=0)
    for s in range(num_scales):
        step = 1 << s
        if step == 1:
            sub = None
        else:
            sub = ((row & (step - 1)) == 0) & ((colw & (step - 1)) == 0)
        subs.append(sub)

        acc = None
        if step < img_w:
            # Subgrid pairs (c, c+step): roll is circular; the wrap and any
            # cross-image spill are killed by the lane boundary mask below.
            d_x = pltpu.roll(d, wp - step, axis=1)   # d_x[r,c] = d[r, c+step]
            m_x = pltpu.roll(m, wp - step, axis=1)
            selx = colw < (img_w - step)
            if sub is not None:
                selx = selx & sub
            acc = jnp.abs(d_x - d) * jnp.where(selx, m_x * m, 0.0)
        if step < h:
            d_y = pltpu.roll(d, h - step, axis=0)    # d_y[r,c] = d[r+step, c]
            m_y = pltpu.roll(m, h - step, axis=0)
            sely = row < (h - step)
            if sub is not None:
                sely = sely & sub
            term = jnp.abs(d_y - d) * jnp.where(sely, m_y * m, 0.0)
            acc = term if acc is None else acc + term
        if acc is not None:
            out_row = jnp.where(lane == s, jnp.sum(acc, keepdims=True), out_row)

    def _with_mask_sums(base):
        # Divisor lanes: strided mask sums of the FIRST batch image only
        # (torch uses mask[:1]); first image lives in lanes [0, img_w).
        first = (col < img_w) if wp != img_w else None
        r = base
        for s in range(num_scales):
            sel = subs[s]
            if first is not None:
                sel = first if sel is None else (sel & first)
            msum = jnp.sum(m if sel is None else jnp.where(sel, m, 0.0),
                           keepdims=True)
            r = jnp.where(lane == num_scales + s, msum, r)
        return r

    if gate_mask_sums:
        @pl.when(pl.program_id(0) == 0)
        def _():
            out_ref[...] = _with_mask_sums(out_row)

        @pl.when(pl.program_id(0) != 0)
        def _():
            out_ref[...] = out_row
    else:
        out_ref[...] = _with_mask_sums(out_row)


def _pow2_floor(n: int) -> int:
    p = 1
    while p * 2 <= n:
        p *= 2
    return p


def _vmem_capacity_bytes() -> int:
    try:
        cap = int(pltpu.get_tpu_info().vmem_capacity_bytes)
        if cap > 0:
            return cap
    except Exception:
        pass
    return 64 * 1024 * 1024     # v7x per-TensorCore VMEM (smallest current gen)


def compute_grad_error(x, mask, scales: int = 4):
    """Pallas forward of PhyReconLoss.compute_grad_error.

    x, mask: (B, H, W); the mask keeps its own dtype (pass it narrow - bf16 /
    int8 - to halve that HBM stream when it is binary).  Returns a scalar f32
    loss: sum over `scales` of  sum_b(grad sums) / sum(mask[:1] strided),
    with the PyTorch divisor==0 guard.
    """
    assert x.ndim == 3 and x.shape == mask.shape, (x.shape, mask.shape)
    b, h, w = x.shape

    # Pack P images along the lane axis so small widths fill 128-lane vregs
    # (32x32 bg raster -> one (32,128) tile); pad the batch with zero images
    # (zero mask => zero contribution) up to a multiple of P.
    p = _pow2_floor(max(1, 128 // w)) if w <= 128 else 1
    g = -(-b // p)
    if g * p != b:
        pad = g * p - b
        x = jnp.concatenate([x, jnp.zeros((pad, h, w), x.dtype)], axis=0)
        mask = jnp.concatenate([mask, jnp.zeros((pad, h, w), mask.dtype)], axis=0)
    wp = p * w
    xp = x.reshape(g, p, h, w).transpose(0, 2, 1, 3).reshape(g, h, wp)
    mp = mask.reshape(g, p, h, w).transpose(0, 2, 1, 3).reshape(g, h, wp)

    # Per-generation VMEM budget: double-buffered input tiles + f32 working
    # set, capped at 60% of this chip's per-core capacity (64 MiB on v7x,
    # 128 MiB on v5e/v6e).
    in_bytes = h * wp * (jnp.dtype(x.dtype).itemsize
                         + jnp.dtype(mask.dtype).itemsize)
    need = 2 * in_bytes + 16 * h * wp * 4 + (1 << 20)
    vmem_limit = int(min(max(need, 16 * 1024 * 1024),
                         (6 * _vmem_capacity_bytes()) // 10))

    out = pl.pallas_call(
        functools.partial(_grad_error_kernel, num_scales=scales, img_w=w,
                          gate_mask_sums=(g > 1)),
        out_shape=jax.ShapeDtypeStruct((g, 1, 2 * scales), jnp.float32),
        grid=(g,),
        in_specs=[
            pl.BlockSpec((None, h, wp), lambda i: (i, 0, 0)),
            pl.BlockSpec((None, h, wp), lambda i: (i, 0, 0)),
        ],
        out_specs=pl.BlockSpec((None, 1, 2 * scales), lambda i: (i, 0, 0)),
        compiler_params=pltpu.CompilerParams(
            dimension_semantics=("parallel",),
            vmem_limit_bytes=vmem_limit,
        ),
    )(xp, mp)

    loss = jnp.sum(out[:, 0, :scales], axis=0)   # (scales,) over all images
    msum = out[0, 0, scales:]                    # (scales,) from mask[:1] only
    safe = jnp.where(msum == 0.0, 1.0, msum)     # guard the untaken 0/0 branch
    return jnp.sum(jnp.where(msum == 0.0, 0.0, loss / safe))


def get_bg_render_loss(bg_depth, bg_normal, mask):
    """Pallas forward of PhyReconLoss.get_bg_render_loss (32x32 bg raster).

    Fused: depth + the 3 normal channels go through ONE pallas_call; both
    original calls divide by the same per-scale sum(mask[:1]), so the fused
    batch reduction equals depth_grad + normal_grad exactly.
    """
    bg_depth = bg_depth.reshape(1, 32, 32)
    bg_normal = jnp.transpose(bg_normal.reshape(32, 32, 3), (2, 0, 1))
    mask = mask.reshape(1, 32, 32)
    x = jnp.concatenate([bg_depth, bg_normal.astype(bg_depth.dtype)], axis=0)
    m = jnp.tile(mask, (4, 1, 1))
    return compute_grad_error(x, m)


# ---------------------------------------------------------------------------
# Pure-JAX references mirroring the PyTorch code, for correctness checks.
# ---------------------------------------------------------------------------
def _reference_compute_grad_error(x, mask, scales: int = 4):
    x = x.astype(jnp.float32)
    mask = mask.astype(jnp.float32)
    total = jnp.float32(0.0)
    for i in range(scales):
        step = 2 ** i
        m = mask[:, ::step, ::step]
        xs = x[:, ::step, ::step]
        msum = jnp.sum(m[:1])
        diff = m * xs
        gx = jnp.abs(diff[:, :, 1:] - diff[:, :, :-1]) * (m[:, :, 1:] * m[:, :, :-1])
        gy = jnp.abs(diff[:, 1:, :] - diff[:, :-1, :]) * (m[:, 1:, :] * m[:, :-1, :])
        image_loss = jnp.sum(gx) + jnp.sum(gy)
        safe = jnp.where(msum == 0.0, 1.0, msum)
        total = total + jnp.where(msum == 0.0, 0.0, image_loss / safe)
    return total


def _reference_bg_render_loss(bg_depth, bg_normal, mask):
    bg_depth = bg_depth.reshape(1, 32, 32)
    bg_normal = jnp.transpose(bg_normal.reshape(32, 32, 3), (2, 0, 1))
    mask = mask.reshape(1, 32, 32)
    return (_reference_compute_grad_error(bg_depth, mask)
            + _reference_compute_grad_error(bg_normal, jnp.tile(mask, (3, 1, 1))))


if __name__ == "__main__":
    keys = jax.random.split(jax.random.PRNGKey(0), 8)

    # 1) Multi-batch compute_grad_error (B=2, 32x32), f32 inputs.
    B, H, W = 2, 32, 32
    x = jax.random.normal(keys[0], (B, H, W), dtype=jnp.float32)
    m = (jax.random.uniform(keys[1], (B, H, W)) > 0.3).astype(jnp.float32)
    out = jax.block_until_ready(compute_grad_error(x, m))
    ref = jax.block_until_ready(_reference_compute_grad_error(x, m))
    assert jnp.allclose(out, ref, rtol=1e-4, atol=1e-4), (out, ref)

    # 2) bf16 x (narrow DMA path; mask stays f32, arithmetic f32 in-kernel).
    x_bf = x.astype(jnp.bfloat16)
    out_bf = jax.block_until_ready(compute_grad_error(x_bf, m))
    ref_bf = jax.block_until_ready(
        _reference_compute_grad_error(x_bf.astype(jnp.float32), m))
    assert jnp.allclose(out_bf, ref_bf, rtol=1e-4, atol=1e-4), (out_bf, ref_bf)

    # 3) Multi-grid-step + batch padding + gated mask-sum path (B=5 -> P=4, grid=2).
    B5 = 5
    x5 = jax.random.normal(keys[2], (B5, H, W), dtype=jnp.float32)
    m5 = (jax.random.uniform(keys[3], (B5, H, W)) > 0.4).astype(jnp.float32)
    out5 = jax.block_until_ready(compute_grad_error(x5, m5))
    ref5 = jax.block_until_ready(_reference_compute_grad_error(x5, m5))
    assert jnp.allclose(out5, ref5, rtol=1e-4, atol=1e-4), (out5, ref5)

    # 4) All-zero mask -> guarded 0/0 -> exact 0.
    out0 = jax.block_until_ready(compute_grad_error(x, jnp.zeros_like(m)))
    assert float(out0) == 0.0, out0

    # 5) Fused get_bg_render_loss: depth (1,32,32) + normal (3,32,32), one call.
    bg_depth = jax.random.normal(keys[4], (H * W,), dtype=jnp.float32)
    bg_normal = jax.random.normal(keys[5], (H * W, 3), dtype=jnp.float32)
    bg_mask = (jax.random.uniform(keys[6], (H * W,)) > 0.4).astype(jnp.float32)
    out_bg = jax.block_until_ready(get_bg_render_loss(bg_depth, bg_normal, bg_mask))
    ref_bg = jax.block_until_ready(
        _reference_bg_render_loss(bg_depth, bg_normal, bg_mask))
    assert jnp.allclose(out_bg, ref_bg, rtol=1e-4, atol=1e-4), (out_bg, ref_bg)

    print("KERNEL_OK")
</pallas_src>

<mosaic_0001>
module attributes {stable_mosaic.version = 11 : i64} {
  func.func @_grad_error_kernel(%arg0: i32, %arg1: memref<1x32x128xf32, #tpu.memory_space<vmem>>, %arg2: memref<1x32x128xf32, #tpu.memory_space<vmem>>, %arg3: memref<1x1x8xf32, #tpu.memory_space<vmem>>) attributes {dimension_semantics = [#tpu.dimension_semantics<parallel>], iteration_bounds = array<i64: 1>, scalar_prefetch = 0 : i64, scratch_operands = 0 : i64, tpu.core_type = #tpu.core_type<tc>, window_params = [{transform_indices = @transform_0, window_bounds = array<i64: 1, 32, 128>}, {transform_indices = @transform_1, window_bounds = array<i64: 1, 32, 128>}, {transform_indices = @transform_2, window_bounds = array<i64: 1, 1, 8>}]} {
    %c0 = arith.constant 0 : index
    %c0_0 = arith.constant 0 : index
    %c0_1 = arith.constant 0 : index
    %0 = vector.load %arg1[%c0, %c0_0, %c0_1] : memref<1x32x128xf32, #tpu.memory_space<vmem>>, vector<1x32x128xf32>
    %1 = vector.shape_cast %0 : vector<1x32x128xf32> to vector<32x128xf32>
    %c0_2 = arith.constant 0 : index
    %c0_3 = arith.constant 0 : index
    %c0_4 = arith.constant 0 : index
    %2 = vector.load %arg2[%c0_2, %c0_3, %c0_4] : memref<1x32x128xf32, #tpu.memory_space<vmem>>, vector<1x32x128xf32>
    %3 = vector.shape_cast %2 : vector<1x32x128xf32> to vector<32x128xf32>
    %4 = arith.mulf %3, %1 : vector<32x128xf32>
    %5 = tpu.iota {dimensions = array<i32: 0>} : vector<32x128xi32>
    %6 = tpu.iota {dimensions = array<i32: 1>} : vector<32x128xi32>
    %c31_i32 = arith.constant 31 : i32
    %7 = vector.broadcast %c31_i32 : i32 to vector<32x128xi32>
    %8 = arith.andi %6, %7 : vector<32x128xi32>
    %9 = tpu.iota {dimensions = array<i32: 1>} : vector<1x8xi32>
    %cst = arith.constant 0.000000e+00 : f32
    %10 = vector.broadcast %cst : f32 to vector<1x8xf32>
    %c127_i32 = arith.constant 127 : i32
    %11 = tpu.dynamic_rotate %4 by %c127_i32 dim 1 : vector<32x128xf32>, i32 -> vector<32x128xf32>
    %c127_i32_5 = arith.constant 127 : i32
    %12 = tpu.dynamic_rotate %3 by %c127_i32_5 dim 1 : vector<32x128xf32>, i32 -> vector<32x128xf32>
    %c31_i32_6 = arith.constant 31 : i32
    %13 = vector.broadcast %c31_i32_6 : i32 to vector<32x128xi32>
    %14 = arith.cmpi slt, %8, %13 : vector<32x128xi32>
    %15 = arith.subf %11, %4 : vector<32x128xf32>
    %16 = math.absf %15 : vector<32x128xf32>
    %17 = arith.mulf %12, %3 : vector<32x128xf32>
    %cst_7 = arith.constant 0.000000e+00 : f32
    %18 = vector.broadcast %cst_7 : f32 to vector<32x128xf32>
    %19 = arith.select %14, %17, %18 : vector<32x128xi1>, vector<32x128xf32>
    %20 = arith.mulf %16, %19 : vector<32x128xf32>
    %c31_i32_8 = arith.constant 31 : i32
    %21 = tpu.dynamic_rotate %4 by %c31_i32_8 dim 0 : vector<32x128xf32>, i32 -> vector<32x128xf32>
    %c31_i32_9 = arith.constant 31 : i32
    %22 = tpu.dynamic_rotate %3 by %c31_i32_9 dim 0 : vector<32x128xf32>, i32 -> vector<32x128xf32>
    %c31_i32_10 = arith.constant 31 : i32
    %23 = vector.broadcast %c31_i32_10 : i32 to vector<32x128xi32>
    %24 = arith.cmpi slt, %5, %23 : vector<32x128xi32>
    %25 = arith.subf %21, %4 : vector<32x128xf32>
    %26 = math.absf %25 : vector<32x128xf32>
    %27 = arith.mulf %22, %3 : vector<32x128xf32>
    %cst_11 = arith.constant 0.000000e+00 : f32
    %28 = vector.broadcast %cst_11 : f32 to vector<32x128xf32>
    %29 = arith.select %24, %27, %28 : vector<32x128xi1>, vector<32x128xf32>
    %30 = arith.mulf %26, %29 : vector<32x128xf32>
    %31 = arith.addf %20, %30 : vector<32x128xf32>
    %c0_i32 = arith.constant 0 : i32
    %32 = vector.broadcast %c0_i32 : i32 to vector<1x8xi32>
    %33 = arith.cmpi eq, %9, %32 : vector<1x8xi32>
    %34 = vector.shape_cast %31 : vector<32x128xf32> to vector<1x32x128xf32>
    %cst_12 = arith.constant dense<0.000000e+00> : vector<1xf32>
    %35 = vector.multi_reduction <add>, %34, %cst_12 [1, 2] : vector<1x32x128xf32> to vector<1xf32>
    %36 = vector.shape_cast %35 : vector<1xf32> to vector<1x1x1xf32>
    %37 = vector.extract %36[0, 0, 0] : f32 from vector<1x1x1xf32>
    %38 = vector.broadcast %37 : f32 to vector<1x1xf32>
    %39 = vector.shape_cast %38 : vector<1x1xf32> to vector<1x1xf32>
    %40 = vector.broadcast %39 : vector<1x1xf32> to vector<1x8xf32>
    %41 = arith.select %33, %40, %10 : vector<1x8xi1>, vector<1x8xf32>
    %c1_i32 = arith.constant 1 : i32
    %42 = vector.broadcast %c1_i32 : i32 to vector<32x128xi32>
    %43 = arith.andi %5, %42 : vector<32x128xi32>
    %c0_i32_13 = arith.constant 0 : i32
    %44 = vector.broadcast %c0_i32_13 : i32 to vector<32x128xi32>
    %45 = arith.cmpi eq, %43, %44 : vector<32x128xi32>
    %c1_i32_14 = arith.constant 1 : i32
    %46 = vector.broadcast %c1_i32_14 : i32 to vector<32x128xi32>
    %47 = arith.andi %8, %46 : vector<32x128xi32>
    %c0_i32_15 = arith.constant 0 : i32
    %48 = vector.broadcast %c0_i32_15 : i32 to vector<32x128xi32>
    %49 = arith.cmpi eq, %47, %48 : vector<32x128xi32>
    %50 = arith.andi %45, %49 : vector<32x128xi1>
    %c126_i32 = arith.constant 126 : i32
    %51 = tpu.dynamic_rotate %4 by %c126_i32 dim 1 : vector<32x128xf32>, i32 -> vector<32x128xf32>
    %c126_i32_16 = arith.constant 126 : i32
    %52 = tpu.dynamic_rotate %3 by %c126_i32_16 dim 1 : vector<32x128xf32>, i32 -> vector<32x128xf32>
    %c30_i32 = arith.constant 30 : i32
    %53 = vector.broadcast %c30_i32 : i32 to vector<32x128xi32>
    %54 = arith.cmpi slt, %8, %53 : vector<32x128xi32>
    %55 = arith.andi %54, %50 : vector<32x128xi1>
    %56 = arith.subf %51, %4 : vector<32x128xf32>
    %57 = math.absf %56 : vector<32x128xf32>
    %58 = arith.mulf %52, %3 : vector<32x128xf32>
    %cst_17 = arith.constant 0.000000e+00 : f32
    %59 = vector.broadcast %cst_17 : f32 to vector<32x128xf32>
    %60 = arith.select %55, %58, %59 : vector<32x128xi1>, vector<32x128xf32>
    %61 = arith.mulf %57, %60 : vector<32x128xf32>
    %c30_i32_18 = arith.constant 30 : i32
    %62 = tpu.dynamic_rotate %4 by %c30_i32_18 dim 0 : vector<32x128xf32>, i32 -> vector<32x128xf32>
    %c30_i32_19 = arith.constant 30 : i32
    %63 = tpu.dynamic_rotate %3 by %c30_i32_19 dim 0 : vector<32x128xf32>, i32 -> vector<32x128xf32>
    %c30_i32_20 = arith.constant 30 : i32
    %64 = vector.broadcast %c30_i32_20 : i32 to vector<32x128xi32>
    %65 = arith.cmpi slt, %5, %64 : vector<32x128xi32>
    %66 = arith.andi %65, %50 : vector<32x128xi1>
    %67 = arith.subf %62, %4 : vector<32x128xf32>
    %68 = math.absf %67 : vector<32x128xf32>
    %69 = arith.mulf %63, %3 : vector<32x128xf32>
    %cst_21 = arith.constant 0.000000e+00 : f32
    %70 = vector.broadcast %cst_21 : f32 to vector<32x128xf32>
    %71 = arith.select %66, %69, %70 : vector<32x128xi1>, vector<32x128xf32>
    %72 = arith.mulf %68, %71 : vector<32x128xf32>
    %73 = arith.addf %61, %72 : vector<32x128xf32>
    %c1_i32_22 = arith.constant 1 : i32
    %74 = vector.broadcast %c1_i32_22 : i32 to vector<1x8xi32>
    %75 = arith.cmpi eq, %9, %74 : vector<1x8xi32>
    %76 = vector.shape_cast %73 : vector<32x128xf32> to vector<1x32x128xf32>
    %cst_23 = arith.constant dense<0.000000e+00> : vector<1xf32>
    %77 = vector.multi_reduction <add>, %76, %cst_23 [1, 2] : vector<1x32x128xf32> to vector<1xf32>
    %78 = vector.shape_cast %77 : vector<1xf32> to vector<1x1x1xf32>
    %79 = vector.extract %78[0, 0, 0] : f32 from vector<1x1x1xf32>
    %80 = vector.broadcast %79 : f32 to vector<1x1xf32>
    %81 = vector.shape_cast %80 : vector<1x1xf32> to vector<1x1xf32>
    %82 = vector.broadcast %81 : vector<1x1xf32> to vector<1x8xf32>
    %83 = arith.select %75, %82, %41 : vector<1x8xi1>, vector<1x8xf32>
    %c3_i32 = arith.constant 3 : i32
    %84 = vector.broadcast %c3_i32 : i32 to vector<32x128xi32>
    %85 = arith.andi %5, %84 : vector<32x128xi32>
    %c0_i32_24 = arith.constant 0 : i32
    %86 = vector.broadcast %c0_i32_24 : i32 to vector<32x128xi32>
    %87 = arith.cmpi eq, %85, %86 : vector<32x128xi32>
    %c3_i32_25 = arith.constant 3 : i32
    %88 = vector.broadcast %c3_i32_25 : i32 to vector<32x128xi32>
    %89 = arith.andi %8, %88 : vector<32x128xi32>
    %c0_i32_26 = arith.constant 0 : i32
    %90 = vector.broadcast %c0_i32_26 : i32 to vector<32x128xi32>
    %91 = arith.cmpi eq, %89, %90 : vector<32x128xi32>
    %92 = arith.andi %87, %91 : vector<32x128xi1>
    %c124_i32 = arith.constant 124 : i32
    %93 = tpu.dynamic_rotate %4 by %c124_i32 dim 1 : vector<32x128xf32>, i32 -> vector<32x128xf32>
    %c124_i32_27 = arith.constant 124 : i32
    %94 = tpu.dynamic_rotate %3 by %c124_i32_27 dim 1 : vector<32x128xf32>, i32 -> vector<32x128xf32>
    %c28_i32 = arith.constant 28 : i32
    %95 = vector.broadcast %c28_i32 : i32 to vector<32x128xi32>
    %96 = arith.cmpi slt, %8, %95 : vector<32x128xi32>
    %97 = arith.andi %96, %92 : vector<32x128xi1>
    %98 = arith.subf %93, %4 : vector<32x128xf32>
    %99 = math.absf %98 : vector<32x128xf32>
    %100 = arith.mulf %94, %3 : vector<32x128xf32>
    %cst_28 = arith.constant 0.000000e+00 : f32
    %101 = vector.broadcast %cst_28 : f32 to vector<32x128xf32>
    %102 = arith.select %97, %100, %101 : vector<32x128xi1>, vector<32x128xf32>
    %103 = arith.mulf %99, %102 : vector<32x128xf32>
    %c28_i32_29 = arith.constant 28 : i32
    %104 = tpu.dynamic_rotate %4 by %c28_i32_29 dim 0 : vector<32x128xf32>, i32 -> vector<32x128xf32>
    %c28_i32_30 = arith.constant 28 : i32
    %105 = tpu.dynamic_rotate %3 by %c28_i32_30 dim 0 : vector<32x128xf32>, i32 -> vector<32x128xf32>
    %c28_i32_31 = arith.constant 28 : i32
    %106 = vector.broadcast %c28_i32_31 : i32 to vector<32x128xi32>
    %107 = arith.cmpi slt, %5, %106 : vector<32x128xi32>
    %108 = arith.andi %107, %92 : vector<32x128xi1>
    %109 = arith.subf %104, %4 : vector<32x128xf32>
    %110 = math.absf %109 : vector<32x128xf32>
    %111 = arith.mulf %105, %3 : vector<32x128xf32>
    %cst_32 = arith.constant 0.000000e+00 : f32
    %112 = vector.broadcast %cst_32 : f32 to vector<32x128xf32>
    %113 = arith.select %108, %111, %112 : vector<32x128xi1>, vector<32x128xf32>
    %114 = arith.mulf %110, %113 : vector<32x128xf32>
    %115 = arith.addf %103, %114 : vector<32x128xf32>
    %c2_i32 = arith.constant 2 : i32
    %116 = vector.broadcast %c2_i32 : i32 to vector<1x8xi32>
    %117 = arith.cmpi eq, %9, %116 : vector<1x8xi32>
    %118 = vector.shape_cast %115 : vector<32x128xf32> to vector<1x32x128xf32>
    %cst_33 = arith.constant dense<0.000000e+00> : vector<1xf32>
    %119 = vector.multi_reduction <add>, %118, %cst_33 [1, 2] : vector<1x32x128xf32> to vector<1xf32>
    %120 = vector.shape_cast %119 : vector<1xf32> to vector<1x1x1xf32>
    %121 = vector.extract %120[0, 0, 0] : f32 from vector<1x1x1xf32>
    %122 = vector.broadcast %121 : f32 to vector<1x1xf32>
    %123 = vector.shape_cast %122 : vector<1x1xf32> to vector<1x1xf32>
    %124 = vector.broadcast %123 : vector<1x1xf32> to vector<1x8xf32>
    %125 = arith.select %117, %124, %83 : vector<1x8xi1>, vector<1x8xf32>
    %c7_i32 = arith.constant 7 : i32
    %126 = vector.broadcast %c7_i32 : i32 to vector<32x128xi32>
    %127 = arith.andi %5, %126 : vector<32x128xi32>
    %c0_i32_34 = arith.constant 0 : i32
    %128 = vector.broadcast %c0_i32_34 : i32 to vector<32x128xi32>
    %129 = arith.cmpi eq, %127, %128 : vector<32x128xi32>
    %c7_i32_35 = arith.constant 7 : i32
    %130 = vector.broadcast %c7_i32_35 : i32 to vector<32x128xi32>
    %131 = arith.andi %8, %130 : vector<32x128xi32>
    %c0_i32_36 = arith.constant 0 : i32
    %132 = vector.broadcast %c0_i32_36 : i32 to vector<32x128xi32>
    %133 = arith.cmpi eq, %131, %132 : vector<32x128xi32>
    %134 = arith.andi %129, %133 : vector<32x128xi1>
    %c120_i32 = arith.constant 120 : i32
    %135 = tpu.dynamic_rotate %4 by %c120_i32 dim 1 : vector<32x128xf32>, i32 -> vector<32x128xf32>
    %c120_i32_37 = arith.constant 120 : i32
    %136 = tpu.dynamic_rotate %3 by %c120_i32_37 dim 1 : vector<32x128xf32>, i32 -> vector<32x128xf32>
    %c24_i32 = arith.constant 24 : i32
    %137 = vector.broadcast %c24_i32 : i32 to vector<32x128xi32>
    %138 = arith.cmpi slt, %8, %137 : vector<32x128xi32>
    %139 = arith.andi %138, %134 : vector<32x128xi1>
    %140 = arith.subf %135, %4 : vector<32x128xf32>
    %141 = math.absf %140 : vector<32x128xf32>
    %142 = arith.mulf %136, %3 : vector<32x128xf32>
    %cst_38 = arith.constant 0.000000e+00 : f32
    %143 = vector.broadcast %cst_38 : f32 to vector<32x128xf32>
    %144 = arith.select %139, %142, %143 : vector<32x128xi1>, vector<32x128xf32>
    %145 = arith.mulf %141, %144 : vector<32x128xf32>
    %c24_i32_39 = arith.constant 24 : i32
    %146 = tpu.dynamic_rotate %4 by %c24_i32_39 dim 0 : vector<32x128xf32>, i32 -> vector<32x128xf32>
    %c24_i32_40 = arith.constant 24 : i32
    %147 = tpu.dynamic_rotate %3 by %c24_i32_40 dim 0 : vector<32x128xf32>, i32 -> vector<32x128xf32>
    %c24_i32_41 = arith.constant 24 : i32
    %148 = vector.broadcast %c24_i32_41 : i32 to vector<32x128xi32>
    %149 = arith.cmpi slt, %5, %148 : vector<32x128xi32>
    %150 = arith.andi %149, %134 : vector<32x128xi1>
    %151 = arith.subf %146, %4 : vector<32x128xf32>
    %152 = math.absf %151 : vector<32x128xf32>
    %153 = arith.mulf %147, %3 : vector<32x128xf32>
    %cst_42 = arith.constant 0.000000e+00 : f32
    %154 = vector.broadcast %cst_42 : f32 to vector<32x128xf32>
    %155 = arith.select %150, %153, %154 : vector<32x128xi1>, vector<32x128xf32>
    %156 = arith.mulf %152, %155 : vector<32x128xf32>
    %157 = arith.addf %145, %156 : vector<32x128xf32>
    %c3_i32_43 = arith.constant 3 : i32
    %158 = vector.broadcast %c3_i32_43 : i32 to vector<1x8xi32>
    %159 = arith.cmpi eq, %9, %158 : vector<1x8xi32>
    %160 = vector.shape_cast %157 : vector<32x128xf32> to vector<1x32x128xf32>
    %cst_44 = arith.constant dense<0.000000e+00> : vector<1xf32>
    %161 = vector.multi_reduction <add>, %160, %cst_44 [1, 2] : vector<1x32x128xf32> to vector<1xf32>
    %162 = vector.shape_cast %161 : vector<1xf32> to vector<1x1x1xf32>
    %163 = vector.extract %162[0, 0, 0] : f32 from vector<1x1x1xf32>
    %164 = vector.broadcast %163 : f32 to vector<1x1xf32>
    %165 = vector.shape_cast %164 : vector<1x1xf32> to vector<1x1xf32>
    %166 = vector.broadcast %165 : vector<1x1xf32> to vector<1x8xf32>
    %167 = arith.select %159, %166, %125 : vector<1x8xi1>, vector<1x8xf32>
    %c32_i32 = arith.constant 32 : i32
    %168 = vector.broadcast %c32_i32 : i32 to vector<32x128xi32>
    %169 = arith.cmpi slt, %6, %168 : vector<32x128xi32>
    %cst_45 = arith.constant 0.000000e+00 : f32
    %170 = vector.broadcast %cst_45 : f32 to vector<32x128xf32>
    %171 = arith.select %169, %3, %170 : vector<32x128xi1>, vector<32x128xf32>
    %172 = vector.shape_cast %171 : vector<32x128xf32> to vector<1x32x128xf32>
    %cst_46 = arith.constant dense<0.000000e+00> : vector<1xf32>
    %173 = vector.multi_reduction <add>, %172, %cst_46 [1, 2] : vector<1x32x128xf32> to vector<1xf32>
    %174 = vector.shape_cast %173 : vector<1xf32> to vector<1x1x1xf32>
    %175 = vector.extract %174[0, 0, 0] : f32 from vector<1x1x1xf32>
    %176 = vector.broadcast %175 : f32 to vector<1x1xf32>
    %c4_i32 = arith.constant 4 : i32
    %177 = vector.broadcast %c4_i32 : i32 to vector<1x8xi32>
    %178 = arith.cmpi eq, %9, %177 : vector<1x8xi32>
    %179 = vector.shape_cast %176 : vector<1x1xf32> to vector<1x1xf32>
    %180 = vector.broadcast %179 : vector<1x1xf32> to vector<1x8xf32>
    %181 = arith.select %178, %180, %167 : vector<1x8xi1>, vector<1x8xf32>
    %182 = arith.andi %50, %169 : vector<32x128xi1>
    %cst_47 = arith.constant 0.000000e+00 : f32
    %183 = vector.broadcast %cst_47 : f32 to vector<32x128xf32>
    %184 = arith.select %182, %3, %183 : vector<32x128xi1>, vector<32x128xf32>
    %185 = vector.shape_cast %184 : vector<32x128xf32> to vector<1x32x128xf32>
    %cst_48 = arith.constant dense<0.000000e+00> : vector<1xf32>
    %186 = vector.multi_reduction <add>, %185, %cst_48 [1, 2] : vector<1x32x128xf32> to vector<1xf32>
    %187 = vector.shape_cast %186 : vector<1xf32> to vector<1x1x1xf32>
    %188 = vector.extract %187[0, 0, 0] : f32 from vector<1x1x1xf32>
    %189 = vector.broadcast %188 : f32 to vector<1x1xf32>
    %c5_i32 = arith.constant 5 : i32
    %190 = vector.broadcast %c5_i32 : i32 to vector<1x8xi32>
    %191 = arith.cmpi eq, %9, %190 : vector<1x8xi32>
    %192 = vector.shape_cast %189 : vector<1x1xf32> to vector<1x1xf32>
    %193 = vector.broadcast %192 : vector<1x1xf32> to vector<1x8xf32>
    %194 = arith.select %191, %193, %181 : vector<1x8xi1>, vector<1x8xf32>
    %195 = arith.andi %92, %169 : vector<32x128xi1>
    %cst_49 = arith.constant 0.000000e+00 : f32
    %196 = vector.broadcast %cst_49 : f32 to vector<32x128xf32>
    %197 = arith.select %195, %3, %196 : vector<32x128xi1>, vector<32x128xf32>
    %198 = vector.shape_cast %197 : vector<32x128xf32> to vector<1x32x128xf32>
    %cst_50 = arith.constant dense<0.000000e+00> : vector<1xf32>
    %199 = vector.multi_reduction <add>, %198, %cst_50 [1, 2] : vector<1x32x128xf32> to vector<1xf32>
    %200 = vector.shape_cast %199 : vector<1xf32> to vector<1x1x1xf32>
    %201 = vector.extract %200[0, 0, 0] : f32 from vector<1x1x1xf32>
    %202 = vector.broadcast %201 : f32 to vector<1x1xf32>
    %c6_i32 = arith.constant 6 : i32
    %203 = vector.broadcast %c6_i32 : i32 to vector<1x8xi32>
    %204 = arith.cmpi eq, %9, %203 : vector<1x8xi32>
    %205 = vector.shape_cast %202 : vector<1x1xf32> to vector<1x1xf32>
    %206 = vector.broadcast %205 : vector<1x1xf32> to vector<1x8xf32>
    %207 = arith.select %204, %206, %194 : vector<1x8xi1>, vector<1x8xf32>
    %208 = arith.andi %134, %169 : vector<32x128xi1>
    %cst_51 = arith.constant 0.000000e+00 : f32
    %209 = vector.broadcast %cst_51 : f32 to vector<32x128xf32>
    %210 = arith.select %208, %3, %209 : vector<32x128xi1>, vector<32x128xf32>
    %211 = vector.shape_cast %210 : vector<32x128xf32> to vector<1x32x128xf32>
    %cst_52 = arith.constant dense<0.000000e+00> : vector<1xf32>
    %212 = vector.multi_reduction <add>, %211, %cst_52 [1, 2] : vector<1x32x128xf32> to vector<1xf32>
    %213 = vector.shape_cast %212 : vector<1xf32> to vector<1x1x1xf32>
    %214 = vector.extract %213[0, 0, 0] : f32 from vector<1x1x1xf32>
    %215 = vector.broadcast %214 : f32 to vector<1x1xf32>
    %c7_i32_53 = arith.constant 7 : i32
    %216 = vector.broadcast %c7_i32_53 : i32 to vector<1x8xi32>
    %217 = arith.cmpi eq, %9, %216 : vector<1x8xi32>
    %218 = vector.shape_cast %215 : vector<1x1xf32> to vector<1x1xf32>
    %219 = vector.broadcast %218 : vector<1x1xf32> to vector<1x8xf32>
    %220 = arith.select %217, %219, %207 : vector<1x8xi1>, vector<1x8xf32>
    %c0_54 = arith.constant 0 : index
    %c0_55 = arith.constant 0 : index
    %c0_56 = arith.constant 0 : index
    %221 = vector.load %arg3[%c0_54, %c0_55, %c0_56] : memref<1x1x8xf32, #tpu.memory_space<vmem>>, vector<1x1x8xf32>
    %222 = vector.shape_cast %221 : vector<1x1x8xf32> to vector<1x8xf32>
    %223 = vector.shape_cast %220 : vector<1x8xf32> to vector<1x1x8xf32>
    tpu.vector_store %arg3[%c0_54, %c0_55, %c0_56], %223 {strides = array<i32>} : memref<1x1x8xf32, #tpu.memory_space<vmem>>, vector<1x1x8xf32>,
    return
  }
  func.func @transform_0(%arg0: i32) -> (i32, i32, i32) {
    %c0_i32 = arith.constant 0 : i32
    %c0_i32_0 = arith.constant 0 : i32
    %c0_i32_1 = arith.constant 0 : i32
    return %arg0, %c0_i32, %c0_i32_0 : i32, i32, i32
  }
  func.func @transform_1(%arg0: i32) -> (i32, i32, i32) {
    %c0_i32 = arith.constant 0 : i32
    %c0_i32_0 = arith.constant 0 : i32
    %c0_i32_1 = arith.constant 0 : i32
    return %arg0, %c0_i32, %c0_i32_0 : i32, i32, i32
  }
  func.func @transform_2(%arg0: i32) -> (i32, i32, i32) {
    %c0_i32 = arith.constant 0 : i32
    %c0_i32_0 = arith.constant 0 : i32
    %c0_i32_1 = arith.constant 0 : i32
    return %arg0, %c0_i32, %c0_i32_0 : i32, i32, i32
  }
}

</mosaic_0001>

<llo_original>
// kernel: tpu_custom_call.1
$region0: #{tpu_custom_call.1}
  #allocation0 [shape = 'u32[]', space=smem, size = 0x4, offset = 0x4, fixed_abs, tag = 'smem constant byte address 0x4 - core index']
  #allocation1 [shape = 'u32[72,128]{1,0:T(1,128)}', space=vmem, size = 0x9000, scoped, tag = 'internal scratch']
  %s0 = inlined_call_operand.hbm [shape: f32[1,32,128], index: 0, kind: input, shape index: {}]
  %s1 = inlined_call_operand.hbm [shape: f32[1,32,128], index: 1, kind: input, shape index: {}]
  %s2 = inlined_call_operand.hbm [shape: f32[1,1,8], index: 2, kind: output, shape index: {}]
  %s3 = sld [smem:[#allocation0]]
  $region26: #{tpu_custom_call.1} parent=0
    _
  %s5 = ssub.s32 1, %s3
  %s6 = scalar_select 0, %s5, %s3
  $region1: #{tpu_custom_call.1} parent=0
    #allocation2 [shape = 'u8[16384]{0}', space=vmem, size = 0x4000, scoped, tag = 'input window, operand 0, single buffered']
    #allocation3 [shape = 's32[1]{0}', space=sflag, size = 0x4, scoped, tag = 'scoped memory for tpu_custom_call.1']
    #allocation4 [shape = 's32[1]{0}', space=sflag, size = 0x4, scoped, tag = 'scoped memory for tpu_custom_call.1']
    #allocation5 [shape = 'u8[16384]{0}', space=vmem, size = 0x4000, scoped, tag = 'input window, operand 1, single buffered']
    #allocation6 [shape = 's32[1]{0}', space=sflag, size = 0x4, scoped, tag = 'scoped memory for tpu_custom_call.1']
    #allocation7 [shape = 'u8[512]{0}', space=vmem, size = 0x400, scoped, tag = 'output window, operand 0, single buffered']
    %7 = vsyncpa [#allocation3], 0
    %8 = vsyncpa [#allocation6], 0
    %9 = vsyncpa [#allocation4], 0
    // Predicated region
    $region2: #{tpu_custom_call.1} parent=1 // pred_check
      _
    $region3: #{tpu_custom_call.1} parent=1 // pred_check_branch
      %11 = sbr.rel (0) target = $region5
    $region4: #{tpu_custom_call.1} parent=1 // pred_region
      %13 = vsyncadd [#allocation3], 0
      %s14 = sshll.u32 %s0, 4
      %s15 = int_to_ptr.hbm [resolvable:$true] %s14
      %s16 = sshll.u32 [#allocation2], 4
      %s17 = int_to_ptr.vmem [resolvable:$true] %s16
      %22 = dma.hbm_to_vmem [thread:$0]  %s15, 512, %s17, [#allocation3], 128, 128, 8
    $region5: #{tpu_custom_call.1} parent=1 // pred_fallthru
      _
    // Predicated region
    $region6: #{tpu_custom_call.1} parent=1 // pred_check
      _
    $region7: #{tpu_custom_call.1} parent=1 // pred_check_branch
      %24 = sbr.rel (0) target = $region9
    $region8: #{tpu_custom_call.1} parent=1 // pred_region
      %26 = vsyncadd [#allocation6], 0
      %s27 = sshll.u32 %s1, 4
      %s28 = int_to_ptr.hbm [resolvable:$true] %s27
      %s29 = sshll.u32 [#allocation5], 4
      %s30 = int_to_ptr.vmem [resolvable:$true] %s29
      %35 = dma.hbm_to_vmem [thread:$0]  %s28, 512, %s30, [#allocation6], 128, 128, 8
    $region9: #{tpu_custom_call.1} parent=1 // pred_fallthru
      _
    // Predicated region
    $region10: #{tpu_custom_call.1} parent=1 // pred_check
      _
    $region11: #{tpu_custom_call.1} parent=1 // pred_check_branch
      %37 = sbr.rel (0) target = $region13
    $region12: #{tpu_custom_call.1} parent=1 // pred_region
      %39 = dma.done [#allocation3], 512
    $region13: #{tpu_custom_call.1} parent=1 // pred_fallthru
      _
    // Predicated region
    $region14: #{tpu_custom_call.1} parent=1 // pred_check
      _
    $region15: #{tpu_custom_call.1} parent=1 // pred_check_branch
      %41 = sbr.rel (0) target = $region17
    $region16: #{tpu_custom_call.1} parent=1 // pred_region
      %43 = dma.done [#allocation6], 512
    $region17: #{tpu_custom_call.1} parent=1 // pred_fallthru
      _
    %v44 = vld [vmem:[#allocation2] sm:$0xff]
    %v45 = vld [vmem:[#allocation2 + $0x8] sm:$0xff]
    %v46 = vld [vmem:[#allocation2 + $0x10] sm:$0xff]
    %v47 = vld [vmem:[#allocation2 + $0x18] sm:$0xff]
    %v48 = vld [vmem:[#allocation5] sm:$0xff]
    %v49 = vld [vmem:[#allocation5 + $0x8] sm:$0xff]
    %v50 = vld [vmem:[#allocation5 + $0x10] sm:$0xff]
    %v51 = vld [vmem:[#allocation5 + $0x18] sm:$0xff]
    %v52 = vmul.f32 %v48, %v44
    %v53 = vmul.f32 %v49, %v45
    %v54 = vmul.f32 %v50, %v46
    %v55 = vmul.f32 %v51, %v47
    %v56 = vlaneseq
    %v57 = vshrl.u32 %v56, 7
    %v58 = vadd.s32 %v57, 8
    %v59 = vadd.s32 %v57, 16
    %v60 = vadd.s32 %v57, 24
    %v61 = vlaneseq
    %v62 = vand.u32 %v61, 127
    %v63 = vand.u32 %v62, 31
    %64 = vrot.lane.b32.xlu0 %v52, 127
    %v65 = vpop.permute.xlu0 %64
    %66 = vrot.lane.b32.xlu0 %v53, 127
    %v67 = vpop.permute.xlu0 %66
    %68 = vrot.lane.b32.xlu0 %v54, 127
    %v69 = vpop.permute.xlu0 %68
    %70 = vrot.lane.b32.xlu0 %v55, 127
    %v71 = vpop.permute.xlu0 %70
    %72 = vrot.lane.b32.xlu0 %v48, 127
    %v73 = vpop.permute.xlu0 %72
    %74 = vrot.lane.b32.xlu0 %v49, 127
    %v75 = vpop.permute.xlu0 %74
    %76 = vrot.lane.b32.xlu0 %v50, 127
    %v77 = vpop.permute.xlu0 %76
    %78 = vrot.lane.b32.xlu0 %v51, 127
    %v79 = vpop.permute.xlu0 %78
    %vm80 = vcmp.lt.s32.totalorder %v63, 31
    %v81 = vsub.f32 %v65, %v52
    %v82 = vsub.f32 %v67, %v53
    %v83 = vsub.f32 %v69, %v54
    %v84 = vsub.f32 %v71, %v55
    %v85 = vand.u32 2147483647, %v81
    %v86 = vand.u32 2147483647, %v82
    %v87 = vand.u32 2147483647, %v83
    %v88 = vand.u32 2147483647, %v84
    %v89 = vmul.f32 %v73, %v48
    %v90 = vmul.f32 %v75, %v49
    %v91 = vmul.f32 %v77, %v50
    %v92 = vmul.f32 %v79, %v51
    %v93 = vsel %vm80, %v89, 0.0
    %v94 = vsel %vm80, %v90, 0.0
    %v95 = vsel %vm80, %v91, 0.0
    %v96 = vsel %vm80, %v92, 0.0
    %v97 = vmul.f32 %v85, %v93
    %v98 = vmul.f32 %v86, %v94
    %v99 = vmul.f32 %v87, %v95
    %v100 = vmul.f32 %v88, %v96
    %v101 = vrot.slane %v52, 1
    %v102 = vrot.slane %v53, 1
    %v103 = vrot.slane %v54, 1
    %v104 = vrot.slane %v55, 1
    %vm105 = vcmp.lt.s32.totalorder %v57, 7
    %v106 = vsel %vm105, %v103, %v104
    %v107 = vsel %vm105, %v102, %v103
    %v108 = vsel %vm105, %v101, %v102
    %v109 = vsel %vm105, %v104, %v101
    %v110 = vrot.slane %v48, 1
    %v111 = vrot.slane %v49, 1
    %v112 = vrot.slane %v50, 1
    %v113 = vrot.slane %v51, 1
    %v114 = vsel %vm105, %v112, %v113
    %v115 = vsel %vm105, %v111, %v112
    %v116 = vsel %vm105, %v110, %v111
    %v117 = vsel %vm105, %v113, %v110
    %vm118 = vcmp.lt.s32.totalorder %v57, 31
    %vm119 = vcmp.lt.s32.totalorder %v58, 31
    %vm120 = vcmp.lt.s32.totalorder %v59, 31
    %vm121 = vcmp.lt.s32.totalorder %v60, 31
    %v122 = vsub.f32 %v108, %v52
    %v123 = vsub.f32 %v107, %v53
    %v124 = vsub.f32 %v106, %v54
    %v125 = vsub.f32 %v109, %v55
    %v126 = vand.u32 2147483647, %v122
    %v127 = vand.u32 2147483647, %v123
    %v128 = vand.u32 2147483647, %v124
    %v129 = vand.u32 2147483647, %v125
    %v130 = vmul.f32 %v116, %v48
    %v131 = vmul.f32 %v115, %v49
    %v132 = vmul.f32 %v114, %v50
    %v133 = vmul.f32 %v117, %v51
    %v134 = vsel %vm118, %v130, 0.0
    %v135 = vsel %vm119, %v131, 0.0
    %v136 = vsel %vm120, %v132, 0.0
    %v137 = vsel %vm121, %v133, 0.0
    %v138 = vmul.f32 %v126, %v134
    %v139 = vmul.f32 %v127, %v135
    %v140 = vmul.f32 %v128, %v136
    %v141 = vmul.f32 %v129, %v137
    %v142 = vadd.f32 %v97, %v138
    %v143 = vadd.f32 %v98, %v139
    %v144 = vadd.f32 %v99, %v140
    %v145 = vadd.f32 %v100, %v141
    %vm146 = vcmp.eq.s32.totalorder %v62, 0
    %v147 = vadd.f32 %v142, %v143
    %v148 = vadd.f32 %v147, %v144
    %v149 = vadd.f32 %v148, %v145
    %150 = vadd.xlane.f32.xlu0 %v149
    %v151 = vpop.xlane.xlu0 %150
    %v152 = vrot.slane %v151, 4
    %v153 = vadd.f32 %v151, %v152
    %v154 = vrot.slane %v153, 2
    %v155 = vadd.f32 %v153, %v154
    %v156 = vrot.slane %v155, 1
    %v157 = vadd.f32 %v155, %v156
    %s158 = vtos %v157
    %v159 = vstv %s158
    %v160 = vsel %vm146, %v159, 0.0
    %v161 = vand.u32 %v57, 1
    %v162 = vand.u32 %v58, 1
    %v163 = vand.u32 %v59, 1
    %v164 = vand.u32 %v60, 1
    %vm165 = vcmp.eq.s32.totalorder %v161, 0
    %vm166 = vcmp.eq.s32.totalorder %v162, 0
    %vm167 = vcmp.eq.s32.totalorder %v163, 0
    %vm168 = vcmp.eq.s32.totalorder %v164, 0
    %v169 = vand.u32 %v63, 1
    %vm170 = vcmp.eq.s32.totalorder %v169, 0
    %vm171 = vmand %vm165, %vm170
    %vm172 = vmand %vm166, %vm170
    %vm173 = vmand %vm167, %vm170
    %vm174 = vmand %vm168, %vm170
    %175 = vrot.lane.b32.xlu0 %v52, 126
    %v176 = vpop.permute.xlu0 %175
    %177 = vrot.lane.b32.xlu0 %v53, 126
    %v178 = vpop.permute.xlu0 %177
    %179 = vrot.lane.b32.xlu0 %v54, 126
    %v180 = vpop.permute.xlu0 %179
    %181 = vrot.lane.b32.xlu0 %v55, 126
    %v182 = vpop.permute.xlu0 %181
    %183 = vrot.lane.b32.xlu0 %v48, 126
    %v184 = vpop.permute.xlu0 %183
    %185 = vrot.lane.b32.xlu0 %v49, 126
    %v186 = vpop.permute.xlu0 %185
    %187 = vrot.lane.b32.xlu0 %v50, 126
    %v188 = vpop.permute.xlu0 %187
    %189 = vrot.lane.b32.xlu0 %v51, 126
    %v190 = vpop.permute.xlu0 %189
    %vm191 = vcmp.lt.s32.totalorder %v63, 30
    %vm192 = vmand %vm191, %vm171
    %vm193 = vmand %vm191, %vm172
    %vm194 = vmand %vm191, %vm173
    %vm195 = vmand %vm191, %vm174
    %v196 = vsub.f32 %v176, %v52
    %v197 = vsub.f32 %v178, %v53
    %v198 = vsub.f32 %v180, %v54
    %v199 = vsub.f32 %v182, %v55
    %v200 = vand.u32 2147483647, %v196
    %v201 = vand.u32 2147483647, %v197
    %v202 = vand.u32 2147483647, %v198
    %v203 = vand.u32 2147483647, %v199
    %v204 = vmul.f32 %v184, %v48
    %v205 = vmul.f32 %v186, %v49
    %v206 = vmul.f32 %v188, %v50
    %v207 = vmul.f32 %v190, %v51
    %v208 = vsel %vm192, %v204, 0.0
    %v209 = vsel %vm193, %v205, 0.0
    %v210 = vsel %vm194, %v206, 0.0
    %v211 = vsel %vm195, %v207, 0.0
    %v212 = vmul.f32 %v200, %v208
    %v213 = vmul.f32 %v201, %v209
    %v214 = vmul.f32 %v202, %v210
    %v215 = vmul.f32 %v203, %v211
    %v216 = vrot.slane %v52, 2
    %v217 = vrot.slane %v53, 2
    %v218 = vrot.slane %v54, 2
    %v219 = vrot.slane %v55, 2
    %vm220 = vcmp.lt.s32.totalorder %v57, 6
    %v221 = vsel %vm220, %v218, %v219
    %v222 = vsel %vm220, %v217, %v218
    %v223 = vsel %vm220, %v216, %v217
    %v224 = vsel %vm220, %v219, %v216
    %v225 = vrot.slane %v48, 2
    %v226 = vrot.slane %v49, 2
    %v227 = vrot.slane %v50, 2
    %v228 = vrot.slane %v51, 2
    %v229 = vsel %vm220, %v227, %v228
    %v230 = vsel %vm220, %v226, %v227
    %v231 = vsel %vm220, %v225, %v226
    %v232 = vsel %vm220, %v228, %v225
    %vm233 = vcmp.lt.s32.totalorder %v57, 30
    %vm234 = vcmp.lt.s32.totalorder %v58, 30
    %vm235 = vcmp.lt.s32.totalorder %v59, 30
    %vm236 = vcmp.lt.s32.totalorder %v60, 30
    %vm237 = vmand %vm233, %vm171
    %vm238 = vmand %vm234, %vm172
    %vm239 = vmand %vm235, %vm173
    %vm240 = vmand %vm236, %vm174
    %v241 = vsub.f32 %v223, %v52
    %v242 = vsub.f32 %v222, %v53
    %v243 = vsub.f32 %v221, %v54
    %v244 = vsub.f32 %v224, %v55
    %v245 = vand.u32 2147483647, %v241
    %v246 = vand.u32 2147483647, %v242
    %v247 = vand.u32 2147483647, %v243
    %v248 = vand.u32 2147483647, %v244
    %v249 = vmul.f32 %v231, %v48
    %v250 = vmul.f32 %v230, %v49
    %v251 = vmul.f32 %v229, %v50
    %v252 = vmul.f32 %v232, %v51
    %v253 = vsel %vm237, %v249, 0.0
    %v254 = vsel %vm238, %v250, 0.0
    %v255 = vsel %vm239, %v251, 0.0
    %v256 = vsel %vm240, %v252, 0.0
    %v257 = vmul.f32 %v245, %v253
    %v258 = vmul.f32 %v246, %v254
    %v259 = vmul.f32 %v247, %v255
    %v260 = vmul.f32 %v248, %v256
    %v261 = vadd.f32 %v212, %v257
    %v262 = vadd.f32 %v213, %v258
    %v263 = vadd.f32 %v214, %v259
    %v264 = vadd.f32 %v215, %v260
    %vm265 = vcmp.eq.s32.totalorder %v62, 1
    %v266 = vadd.f32 %v261, %v262
    %v267 = vadd.f32 %v266, %v263
    %v268 = vadd.f32 %v267, %v264
    %269 = vadd.xlane.f32.xlu0 %v268
    %v270 = vpop.xlane.xlu0 %269
    %v271 = vrot.slane %v270, 4
    %v272 = vadd.f32 %v270, %v271
    %v273 = vrot.slane %v272, 2
    %v274 = vadd.f32 %v272, %v273
    %v275 = vrot.slane %v274, 1
    %v276 = vadd.f32 %v274, %v275
    %s277 = vtos %v276
    %v278 = vstv %s277
    %v279 = vsel %vm265, %v278, %v160
    %v280 = vand.u32 %v57, 3
    %v281 = vand.u32 %v58, 3
    %v282 = vand.u32 %v59, 3
    %v283 = vand.u32 %v60, 3
    %vm284 = vcmp.eq.s32.totalorder %v280, 0
    %vm285 = vcmp.eq.s32.totalorder %v281, 0
    %vm286 = vcmp.eq.s32.totalorder %v282, 0
    %vm287 = vcmp.eq.s32.totalorder %v283, 0
    %v288 = vand.u32 %v63, 3
    %vm289 = vcmp.eq.s32.totalorder %v288, 0
    %vm290 = vmand %vm284, %vm289
    %vm291 = vmand %vm285, %vm289
    %vm292 = vmand %vm286, %vm289
    %vm293 = vmand %vm287, %vm289
    %294 = vrot.lane.b32.xlu0 %v52, 124
    %v295 = vpop.permute.xlu0 %294
    %296 = vrot.lane.b32.xlu0 %v53, 124
    %v297 = vpop.permute.xlu0 %296
    %298 = vrot.lane.b32.xlu0 %v54, 124
    %v299 = vpop.permute.xlu0 %298
    %300 = vrot.lane.b32.xlu0 %v55, 124
    %v301 = vpop.permute.xlu0 %300
    %302 = vrot.lane.b32.xlu0 %v48, 124
    %v303 = vpop.permute.xlu0 %302
    %304 = vrot.lane.b32.xlu0 %v49, 124
    %v305 = vpop.permute.xlu0 %304
    %306 = vrot.lane.b32.xlu0 %v50, 124
    %v307 = vpop.permute.xlu0 %306
    %308 = vrot.lane.b32.xlu0 %v51, 124
    %v309 = vpop.permute.xlu0 %308
    %vm310 = vcmp.lt.s32.totalorder %v63, 28
    %vm311 = vmand %vm310, %vm290
    %vm312 = vmand %vm310, %vm291
    %vm313 = vmand %vm310, %vm292
    %vm314 = vmand %vm310, %vm293
    %v315 = vsub.f32 %v295, %v52
    %v316 = vsub.f32 %v297, %v53
    %v317 = vsub.f32 %v299, %v54
    %v318 = vsub.f32 %v301, %v55
    %v319 = vand.u32 2147483647, %v315
    %v320 = vand.u32 2147483647, %v316
    %v321 = vand.u32 2147483647, %v317
    %v322 = vand.u32 2147483647, %v318
    %v323 = vmul.f32 %v303, %v48
    %v324 = vmul.f32 %v305, %v49
    %v325 = vmul.f32 %v307, %v50
    %v326 = vmul.f32 %v309, %v51
    %v327 = vsel %vm311, %v323, 0.0
    %v328 = vsel %vm312, %v324, 0.0
    %v329 = vsel %vm313, %v325, 0.0
    %v330 = vsel %vm314, %v326, 0.0
    %v331 = vmul.f32 %v319, %v327
    %v332 = vmul.f32 %v320, %v328
    %v333 = vmul.f32 %v321, %v329
    %v334 = vmul.f32 %v322, %v330
    %v335 = vrot.slane %v52, 4
    %v336 = vrot.slane %v53, 4
    %v337 = vrot.slane %v54, 4
    %v338 = vrot.slane %v55, 4
    %vm339 = vcmp.lt.s32.totalorder %v57, 4
    %v340 = vsel %vm339, %v337, %v338
    %v341 = vsel %vm339, %v336, %v337
    %v342 = vsel %vm339, %v335, %v336
    %v343 = vsel %vm339, %v338, %v335
    %v344 = vrot.slane %v48, 4
    %v345 = vrot.slane %v49, 4
    %v346 = vrot.slane %v50, 4
    %v347 = vrot.slane %v51, 4
    %v348 = vsel %vm339, %v346, %v347
    %v349 = vsel %vm339, %v345, %v346
    %v350 = vsel %vm339, %v344, %v345
    %v351 = vsel %vm339, %v347, %v344
    %vm352 = vcmp.lt.s32.totalorder %v57, 28
    %vm353 = vcmp.lt.s32.totalorder %v58, 28
    %vm354 = vcmp.lt.s32.totalorder %v59, 28
    %vm355 = vcmp.lt.s32.totalorder %v60, 28
    %vm356 = vmand %vm352, %vm290
    %vm357 = vmand %vm353, %vm291
    %vm358 = vmand %vm354, %vm292
    %vm359 = vmand %vm355, %vm293
    %v360 = vsub.f32 %v342, %v52
    %v361 = vsub.f32 %v341, %v53
    %v362 = vsub.f32 %v340, %v54
    %v363 = vsub.f32 %v343, %v55
    %v364 = vand.u32 2147483647, %v360
    %v365 = vand.u32 2147483647, %v361
    %v366 = vand.u32 2147483647, %v362
    %v367 = vand.u32 2147483647, %v363
    %v368 = vmul.f32 %v350, %v48
    %v369 = vmul.f32 %v349, %v49
    %v370 = vmul.f32 %v348, %v50
    %v371 = vmul.f32 %v351, %v51
    %v372 = vsel %vm356, %v368, 0.0
    %v373 = vsel %vm357, %v369, 0.0
    %v374 = vsel %vm358, %v370, 0.0
    %v375 = vsel %vm359, %v371, 0.0
    %v376 = vmul.f32 %v364, %v372
    %v377 = vmul.f32 %v365, %v373
    %v378 = vmul.f32 %v366, %v374
    %v379 = vmul.f32 %v367, %v375
    %v380 = vadd.f32 %v331, %v376
    %v381 = vadd.f32 %v332, %v377
    %v382 = vadd.f32 %v333, %v378
    %v383 = vadd.f32 %v334, %v379
    %vm384 = vcmp.eq.s32.totalorder %v62, 2
    %v385 = vadd.f32 %v380, %v381
    %v386 = vadd.f32 %v385, %v382
    %v387 = vadd.f32 %v386, %v383
    %388 = vadd.xlane.f32.xlu0 %v387
    %v389 = vpop.xlane.xlu0 %388
    %v390 = vrot.slane %v389, 4
    %v391 = vadd.f32 %v389, %v390
    %v392 = vrot.slane %v391, 2
    %v393 = vadd.f32 %v391, %v392
    %v394 = vrot.slane %v393, 1
    %v395 = vadd.f32 %v393, %v394
    %s396 = vtos %v395
    %v397 = vstv %s396
    %v398 = vsel %vm384, %v397, %v279
    %v399 = vand.u32 %v57, 7
    %v400 = vand.u32 %v58, 7
    %v401 = vand.u32 %v59, 7
    %v402 = vand.u32 %v60, 7
    %vm403 = vcmp.eq.s32.totalorder %v399, 0
    %vm404 = vcmp.eq.s32.totalorder %v400, 0
    %vm405 = vcmp.eq.s32.totalorder %v401, 0
    %vm406 = vcmp.eq.s32.totalorder %v402, 0
    %v407 = vand.u32 %v63, 7
    %vm408 = vcmp.eq.s32.totalorder %v407, 0
    %vm409 = vmand %vm403, %vm408
    %vm410 = vmand %vm404, %vm408
    %vm411 = vmand %vm405, %vm408
    %vm412 = vmand %vm406, %vm408
    %413 = vrot.lane.b32.xlu0 %v52, 120
    %v414 = vpop.permute.xlu0 %413
    %415 = vrot.lane.b32.xlu0 %v53, 120
    %v416 = vpop.permute.xlu0 %415
    %417 = vrot.lane.b32.xlu0 %v54, 120
    %v418 = vpop.permute.xlu0 %417
    %419 = vrot.lane.b32.xlu0 %v55, 120
    %v420 = vpop.permute.xlu0 %419
    %421 = vrot.lane.b32.xlu0 %v48, 120
    %v422 = vpop.permute.xlu0 %421
    %423 = vrot.lane.b32.xlu0 %v49, 120
    %v424 = vpop.permute.xlu0 %423
    %425 = vrot.lane.b32.xlu0 %v50, 120
    %v426 = vpop.permute.xlu0 %425
    %427 = vrot.lane.b32.xlu0 %v51, 120
    %v428 = vpop.permute.xlu0 %427
    %vm429 = vcmp.lt.s32.totalorder %v63, 24
    %vm430 = vmand %vm429, %vm409
    %vm431 = vmand %vm429, %vm410
    %vm432 = vmand %vm429, %vm411
    %vm433 = vmand %vm429, %vm412
    %v434 = vsub.f32 %v414, %v52
    %v435 = vsub.f32 %v416, %v53
    %v436 = vsub.f32 %v418, %v54
    %v437 = vsub.f32 %v420, %v55
    %v438 = vand.u32 2147483647, %v434
    %v439 = vand.u32 2147483647, %v435
    %v440 = vand.u32 2147483647, %v436
    %v441 = vand.u32 2147483647, %v437
    %v442 = vmul.f32 %v422, %v48
    %v443 = vmul.f32 %v424, %v49
    %v444 = vmul.f32 %v426, %v50
    %v445 = vmul.f32 %v428, %v51
    %v446 = vsel %vm430, %v442, 0.0
    %v447 = vsel %vm431, %v443, 0.0
    %v448 = vsel %vm432, %v444, 0.0
    %v449 = vsel %vm433, %v445, 0.0
    %v450 = vmul.f32 %v438, %v446
    %v451 = vmul.f32 %v439, %v447
    %v452 = vmul.f32 %v440, %v448
    %v453 = vmul.f32 %v441, %v449
    %vm454 = vcmp.lt.s32.totalorder %v57, 24
    %vm455 = vcmp.lt.s32.totalorder %v58, 24
    %vm456 = vcmp.lt.s32.totalorder %v59, 24
    %vm457 = vcmp.lt.s32.totalorder %v60, 24
    %vm458 = vmand %vm454, %vm409
    %vm459 = vmand %vm455, %vm410
    %vm460 = vmand %vm456, %vm411
    %vm461 = vmand %vm457, %vm412
    %v462 = vsub.f32 %v53, %v52
    %v463 = vsub.f32 %v54, %v53
    %v464 = vsub.f32 %v55, %v54
    %v465 = vsub.f32 %v52, %v55
    %v466 = vand.u32 2147483647, %v462
    %v467 = vand.u32 2147483647, %v463
    %v468 = vand.u32 2147483647, %v464
    %v469 = vand.u32 2147483647, %v465
    %v470 = vmul.f32 %v49, %v48
    %v471 = vmul.f32 %v50, %v49
    %v472 = vmul.f32 %v51, %v50
    %v473 = vmul.f32 %v48, %v51
    %v474 = vsel %vm458, %v470, 0.0
    %v475 = vsel %vm459, %v471, 0.0
    %v476 = vsel %vm460, %v472, 0.0
    %v477 = vsel %vm461, %v473, 0.0
    %v478 = vmul.f32 %v466, %v474
    %v479 = vmul.f32 %v467, %v475
    %v480 = vmul.f32 %v468, %v476
    %v481 = vmul.f32 %v469, %v477
    %v482 = vadd.f32 %v450, %v478
    %v483 = vadd.f32 %v451, %v479
    %v484 = vadd.f32 %v452, %v480
    %v485 = vadd.f32 %v453, %v481
    %vm486 = vcmp.eq.s32.totalorder %v62, 3
    %v487 = vadd.f32 %v482, %v483
    %v488 = vadd.f32 %v487, %v484
    %v489 = vadd.f32 %v488, %v485
    %490 = vadd.xlane.f32.xlu0 %v489
    %v491 = vpop.xlane.xlu0 %490
    %v492 = vrot.slane %v491, 4
    %v493 = vadd.f32 %v491, %v492
    %v494 = vrot.slane %v493, 2
    %v495 = vadd.f32 %v493, %v494
    %v496 = vrot.slane %v495, 1
    %v497 = vadd.f32 %v495, %v496
    %s498 = vtos %v497
    %v499 = vstv %s498
    %v500 = vsel %vm486, %v499, %v398
    %vm501 = vcmp.lt.s32.totalorder %v62, 32
    %v502 = vsel %vm501, %v48, 0.0
    %v503 = vsel %vm501, %v49, 0.0
    %v504 = vsel %vm501, %v50, 0.0
    %v505 = vsel %vm501, %v51, 0.0
    %v506 = vadd.f32 %v502, %v503
    %v507 = vadd.f32 %v506, %v504
    %v508 = vadd.f32 %v507, %v505
    %509 = vadd.xlane.f32.xlu0 %v508
    %v510 = vpop.xlane.xlu0 %509
    %v511 = vrot.slane %v510, 4
    %v512 = vadd.f32 %v510, %v511
    %v513 = vrot.slane %v512, 2
    %v514 = vadd.f32 %v512, %v513
    %v515 = vrot.slane %v514, 1
    %v516 = vadd.f32 %v514, %v515
    %s517 = vtos %v516
    %vm518 = vcmp.eq.s32.totalorder %v62, 4
    %v519 = vstv %s517
    %v520 = vsel %vm518, %v519, %v500
    %vm521 = vmand %vm171, %vm501
    %vm522 = vmand %vm172, %vm501
    %vm523 = vmand %vm173, %vm501
    %vm524 = vmand %vm174, %vm501
    %v525 = vsel %vm521, %v48, 0.0
    %v526 = vsel %vm522, %v49, 0.0
    %v527 = vsel %vm523, %v50, 0.0
    %v528 = vsel %vm524, %v51, 0.0
    %v529 = vadd.f32 %v525, %v526
    %v530 = vadd.f32 %v529, %v527
    %v531 = vadd.f32 %v530, %v528
    %532 = vadd.xlane.f32.xlu0 %v531
    %v533 = vpop.xlane.xlu0 %532
    %v534 = vrot.slane %v533, 4
    %v535 = vadd.f32 %v533, %v534
    %v536 = vrot.slane %v535, 2
    %v537 = vadd.f32 %v535, %v536
    %v538 = vrot.slane %v537, 1
    %v539 = vadd.f32 %v537, %v538
    %s540 = vtos %v539
    %vm541 = vcmp.eq.s32.totalorder %v62, 5
    %v542 = vstv %s540
    %v543 = vsel %vm541, %v542, %v520
    %vm544 = vmand %vm290, %vm501
    %vm545 = vmand %vm291, %vm501
    %vm546 = vmand %vm292, %vm501
    %vm547 = vmand %vm293, %vm501
    %v548 = vsel %vm544, %v48, 0.0
    %v549 = vsel %vm545, %v49, 0.0
    %v550 = vsel %vm546, %v50, 0.0
    %v551 = vsel %vm547, %v51, 0.0
    %v552 = vadd.f32 %v548, %v549
    %v553 = vadd.f32 %v552, %v550
    %v554 = vadd.f32 %v553, %v551
    %555 = vadd.xlane.f32.xlu0 %v554
    %v556 = vpop.xlane.xlu0 %555
    %v557 = vrot.slane %v556, 4
    %v558 = vadd.f32 %v556, %v557
    %v559 = vrot.slane %v558, 2
    %v560 = vadd.f32 %v558, %v559
    %v561 = vrot.slane %v560, 1
    %v562 = vadd.f32 %v560, %v561
    %s563 = vtos %v562
    %vm564 = vcmp.eq.s32.totalorder %v62, 6
    %v565 = vstv %s563
    %v566 = vsel %vm564, %v565, %v543
    %vm567 = vmand %vm409, %vm501
    %vm568 = vmand %vm410, %vm501
    %vm569 = vmand %vm411, %vm501
    %vm570 = vmand %vm412, %vm501
    %v571 = vsel %vm567, %v48, 0.0
    %v572 = vsel %vm568, %v49, 0.0
    %v573 = vsel %vm569, %v50, 0.0
    %v574 = vsel %vm570, %v51, 0.0
    %v575 = vadd.f32 %v571, %v572
    %v576 = vadd.f32 %v575, %v573
    %v577 = vadd.f32 %v576, %v574
    %578 = vadd.xlane.f32.xlu0 %v577
    %v579 = vpop.xlane.xlu0 %578
    %v580 = vrot.slane %v579, 4
    %v581 = vadd.f32 %v579, %v580
    %v582 = vrot.slane %v581, 2
    %v583 = vadd.f32 %v581, %v582
    %v584 = vrot.slane %v583, 1
    %v585 = vadd.f32 %v583, %v584
    %s586 = vtos %v585
    %vm587 = vcmp.eq.s32.totalorder %v62, 7
    %v588 = vstv %s586
    %v589 = vsel %vm587, %v588, %v566
    %vm590 = vcmask 57344
    %591 = vst.msk [vmem:[#allocation7] sm:$0x1] %vm590, %v589
    // Predicated region
    $region18: #{tpu_custom_call.1} parent=1 // pred_check
      _
    $region19: #{tpu_custom_call.1} parent=1 // pred_check_branch
      %593 = sbr.rel (0) target = $region21
    $region20: #{tpu_custom_call.1} parent=1 // pred_region
      %595 = vsyncadd [#allocation4], 0
      %s597 = sshll.u32 [#allocation7], 4
      %s598 = int_to_ptr.vmem [resolvable:$true] %s597
      %s599 = sshll.u32 %s2, 4
      %s600 = int_to_ptr.hbm [resolvable:$true] %s599
      %602 = dma.vmem_to_hbm [thread:$0]  %s598, 16, %s600, [#allocation4]
    $region21: #{tpu_custom_call.1} parent=1 // pred_fallthru
      _
    // Predicated region
    $region22: #{tpu_custom_call.1} parent=1 // pred_check
      _
    $region23: #{tpu_custom_call.1} parent=1 // pred_check_branch
      %604 = sbr.rel (0) target = $region25
    $region24: #{tpu_custom_call.1} parent=1 // pred_region
      %606 = dma.done [#allocation4], 16
    $region25: #{tpu_custom_call.1} parent=1 // pred_fallthru
      _
    %607 = vsyncpa [#allocation3], 1
    %608 = vsyncpa [#allocation6], 1
    %609 = vsyncpa [#allocation4], 1

</llo_original>
